<compile_context>
chip_gen: v7x
topology: tpu7x:2x2x1
jax: 0.10.0
libtpu: 0.0.40
codegen_flags: <defaults>
</compile_context>

<pallas_src>
import functools

import jax
import jax.numpy as jnp
import numpy as np
from jax.experimental import pallas as pl
from jax.experimental.pallas import tpu as pltpu

BN_EPS = 1e-5
_VMEM_LIMIT = 48 * 1024 * 1024   # leaves headroom under v7x's 64 MiB physical VMEM


def _conv_tile(xm_ref, xl_ref, xr_ref, w_ref, tile, *, tl, length):
    """k=3 / pad=1 Conv1d on one (C_in, TL) lane tile -> (C_out, TL) f32.

    xm_ref : (1, C_in, TL)   main tile, input positions [tile*TL, tile*TL+TL)
    xl_ref : (1, C_in, 128)  left-neighbour block  (lane 127 == x[tile*TL - 1])
    xr_ref : (1, C_in, 128)  right-neighbour block (lane 0   == x[(tile+1)*TL])
    w_ref  : (C_out, 3*C_in) taps packed as [k=0 | k=1 | k=2]
    tile   : traced logical L-tile index (for boundary masks)
    """
    xm = xm_ref[0]                                               # (C_in, TL)
    lane = jax.lax.broadcasted_iota(jnp.int32, (1, tl), 1)

    # tap k=0 : input position l-1  (roll right by one lane + left boundary fixup)
    left = pltpu.roll(xm, shift=1, axis=1)
    lfix = jnp.where(tile > 0, xl_ref[0, :, 127:128], 0.0)        # zero pad at l = -1
    left = jnp.where(lane == 0, lfix, left)

    # tap k=2 : input position l+1  (roll left by one lane + right boundary fixup)
    right = pltpu.roll(xm, shift=tl - 1, axis=1)                  # == roll by -1
    right = jnp.where(lane == tl - 1, xr_ref[0, :, 0:1], right)
    right = jnp.where(lane < length - tile * tl - 1, right, 0.0)  # zero pad at l >= L

    # single MXU push: contraction over 3*C_in
    x3 = jnp.concatenate([left, xm, right], axis=0)               # (3*C_in, TL)
    return jnp.dot(w_ref[...], x3, preferred_element_type=jnp.float32)


def _stats_kernel(xm_ref, xl_ref, xr_ref, w_ref, s_ref, *, tl, length, nt, ct):
    # grid = (N, chunks, tiles_per_chunk); s block (1,1,C_out,2) revisited over t
    p = pl.program_id(1)
    t = pl.program_id(2)
    tile = p * ct + t                       # logical L-tile handled by this step

    @pl.when(t == 0)
    def _():
        s_ref[...] = jnp.zeros_like(s_ref)

    tile_c = jnp.minimum(tile, nt - 1)      # matches the clamped index_maps
    y = _conv_tile(xm_ref, xl_ref, xr_ref, w_ref, tile_c, tl=tl, length=length)

    if length % tl != 0:                    # only the ragged last tile needs masking
        col = jax.lax.broadcasted_iota(jnp.int32, (1, tl), 1) + tile_c * tl
        y = jnp.where(col < length, y, 0.0)

    part = jnp.concatenate(
        [jnp.sum(y, axis=-1, keepdims=True),
         jnp.sum(y * y, axis=-1, keepdims=True)], axis=-1)        # (C_out, 2)

    @pl.when(tile < nt)                     # drop padded tiles of the last chunk
    def _():
        s_ref[0, 0] += part


def _norm_kernel(xm_ref, xl_ref, xr_ref, w_ref, scale_ref, shift_ref, o_ref, *,
                 tl, length):
    t = pl.program_id(1)
    y = _conv_tile(xm_ref, xl_ref, xr_ref, w_ref, t, tl=tl, length=length)
    # single FMA per element + ReLU, stored lane-dense in NCL layout
    o_ref[0] = jnp.maximum(y * scale_ref[...] + shift_ref[...],
                           0.0).astype(o_ref.dtype)


def conv_trans_bn(x, conv_w, conv_b, bn_gamma, bn_beta, *,
                  tile_l=1024, matmul_dtype=None, out_dtype=None, stats_chunks=2):
    """x: (N, C_in, L); conv_w: (C_out, C_in, 3); conv_b/bn_*: (C_out,).

    matmul_dtype=jnp.bfloat16 halves input HBM traffic on all generations
    (f32 accumulation / f32 BN math); the cast only pays off when it fuses with
    the producer of x, so the default keeps x's dtype (no extra copy).
    out_dtype=jnp.bfloat16 halves the output stream.
    """
    del conv_b   # additive conv bias cancels exactly under training-mode BatchNorm
    n, c_in, length = x.shape
    c_out = conv_w.shape[0]
    matmul_dtype = x.dtype if matmul_dtype is None else matmul_dtype
    out_dtype = x.dtype if out_dtype is None else out_dtype

    assert tile_l % 128 == 0
    tl = max(128, min(tile_l, pl.cdiv(length, 128) * 128))   # lane tile (mult. of 128)
    nt = pl.cdiv(length, tl)                                 # number of L tiles
    hs = tl // 128                                           # 128-lane blocks per tile
    nb = pl.cdiv(length, 128)                                # 128-lane blocks in x
    n_chunks = max(1, min(stats_chunks, nt))                 # pass-1 parallel L chunks
    ct = pl.cdiv(nt, n_chunks)                               # tiles per chunk

    xq = x.astype(matmul_dtype)                              # no-op for default dtype
    # taps packed for a single 3*C_in-contraction matmul: columns [k=0 | k=1 | k=2]
    w_packed = jnp.transpose(conv_w, (0, 2, 1)).reshape(
        c_out, 3 * c_in).astype(matmul_dtype)

    def make_in_specs(tile_of):
        """main / left-halo / right-halo / weight specs for a given tile-index fn."""
        def main(*g):
            i, tile = tile_of(*g)
            return (i, 0, tile)

        def lhalo(*g):
            i, tile = tile_of(*g)
            return (i, 0, jnp.maximum(tile * hs - 1, 0))

        def rhalo(*g):
            i, tile = tile_of(*g)
            return (i, 0, jnp.minimum((tile + 1) * hs, nb - 1))

        return [pl.BlockSpec((1, c_in, tl), main),
                pl.BlockSpec((1, c_in, 128), lhalo),
                pl.BlockSpec((1, c_in, 128), rhalo),
                pl.BlockSpec((c_out, 3 * c_in), lambda *g: (0, 0))]

    # ---- pass 1: per-channel sum / sum-of-squares of the conv output ----
    stats = pl.pallas_call(
        functools.partial(_stats_kernel, tl=tl, length=length, nt=nt, ct=ct),
        out_shape=jax.ShapeDtypeStruct((n, n_chunks, c_out, 2), jnp.float32),
        grid=(n, n_chunks, ct),
        in_specs=make_in_specs(lambda i, p, t: (i, jnp.minimum(p * ct + t, nt - 1))),
        out_specs=pl.BlockSpec((1, 1, c_out, 2), lambda i, p, t: (i, p, 0, 0)),
        compiler_params=pltpu.CompilerParams(
            dimension_semantics=("parallel", "parallel", "arbitrary"),
            vmem_limit_bytes=_VMEM_LIMIT),
    )(xq, xq, xq, w_packed)

    # ---- glue (tiny, C_out-sized): fold BN into scale/shift ----
    cnt = float(n * length)
    ch_sum = jnp.sum(stats[..., 0], axis=(0, 1))             # (C_out,)
    ch_sumsq = jnp.sum(stats[..., 1], axis=(0, 1))
    mean = ch_sum / cnt
    # biased variance (training-mode BN); guard tiny negatives from cancellation
    var = jnp.maximum(ch_sumsq / cnt - mean * mean, 0.0)
    scale = bn_gamma.astype(jnp.float32) * jax.lax.rsqrt(var + BN_EPS)
    shift = bn_beta.astype(jnp.float32) - mean * scale
    scale_col = scale.reshape(c_out, 1)
    shift_col = shift.reshape(c_out, 1)

    # ---- pass 2: recompute conv tile, normalize + ReLU, write NCL directly ----
    out = pl.pallas_call(
        functools.partial(_norm_kernel, tl=tl, length=length),
        out_shape=jax.ShapeDtypeStruct((n, c_out, length), out_dtype),
        grid=(n, nt),
        in_specs=make_in_specs(lambda i, t: (i, t)) + [
            pl.BlockSpec((c_out, 1), lambda i, t: (0, 0)),
            pl.BlockSpec((c_out, 1), lambda i, t: (0, 0))],
        out_specs=pl.BlockSpec((1, c_out, tl), lambda i, t: (i, 0, t)),
        compiler_params=pltpu.CompilerParams(
            dimension_semantics=("parallel", "parallel"),
            vmem_limit_bytes=_VMEM_LIMIT),
    )(xq, xq, xq, w_packed, scale_col, shift_col)
    return out


def _reference(x, conv_w, conv_b, bn_gamma, bn_beta):
    # pure-JAX reference (includes the conv bias; it cancels under BN)
    y = jax.lax.conv_general_dilated(
        x, conv_w, window_strides=(1,), padding=((1, 1),),
        dimension_numbers=("NCH", "OIH", "NCH"))
    y = y + conv_b[None, :, None]
    mean = jnp.mean(y, axis=(0, 2), keepdims=True)
    var = jnp.mean((y - mean) ** 2, axis=(0, 2), keepdims=True)
    y = (y - mean) * jax.lax.rsqrt(var + BN_EPS)
    y = bn_gamma[None, :, None] * y + bn_beta[None, :, None]
    return jnp.maximum(y, 0.0)


if __name__ == "__main__":
    def _run_case(key, n, c_in, c_out, length, **kw):
        k1, k2, k3, k4, k5 = jax.random.split(key, 5)
        x = jax.random.normal(k1, (n, c_in, length), dtype=jnp.float32)
        fan_in = c_in * 3
        conv_w = jax.random.uniform(k2, (c_out, c_in, 3), jnp.float32,
                                    -1.0, 1.0) / np.sqrt(fan_in)
        conv_b = jax.random.uniform(k3, (c_out,), jnp.float32,
                                    -1.0, 1.0) / np.sqrt(fan_in)
        bn_gamma = jax.random.uniform(k4, (c_out,), jnp.float32, 0.5, 1.5)
        bn_beta = 0.1 * jax.random.normal(k5, (c_out,), jnp.float32)

        out = jax.block_until_ready(
            conv_trans_bn(x, conv_w, conv_b, bn_gamma, bn_beta, **kw))
        ref = _reference(x, conv_w, conv_b, bn_gamma, bn_beta)
        np.testing.assert_allclose(np.asarray(out), np.asarray(ref),
                                   rtol=1e-4, atol=1e-4)

    key = jax.random.PRNGKey(0)
    k0, k1, k2 = jax.random.split(key, 3)
    # small, spec-consistent shape
    _run_case(k0, n=2, c_in=4, c_out=8, length=16)
    # ragged multi-tile: exercises halo crossings, chunked stats, partial blocks
    _run_case(k1, n=2, c_in=6, c_out=10, length=300, tile_l=128)
    # exact tile multiple (static mask skip) with N=1 chunked stats
    _run_case(k2, n=1, c_in=5, c_out=7, length=256, tile_l=128)
    print("KERNEL_OK")
</pallas_src>

<mosaic_0001>
module attributes {stable_mosaic.version = 11 : i64} {
  func.func @_stats_kernel(%arg0: i32, %arg1: i32, %arg2: i32, %arg3: memref<1x4x128xf32, #tpu.memory_space<vmem>>, %arg4: memref<1x4x128xf32, #tpu.memory_space<vmem>>, %arg5: memref<1x4x128xf32, #tpu.memory_space<vmem>>, %arg6: memref<8x12xf32, #tpu.memory_space<vmem>>, %arg7: memref<1x1x8x2xf32, #tpu.memory_space<vmem>>) attributes {dimension_semantics = [#tpu.dimension_semantics<parallel>, #tpu.dimension_semantics<parallel>, #tpu.dimension_semantics<arbitrary>], iteration_bounds = array<i64: 2, 1, 1>, scalar_prefetch = 0 : i64, scratch_operands = 0 : i64, tpu.core_type = #tpu.core_type<tc>, window_params = [{transform_indices = @transform_0, window_bounds = array<i64: 1, 4, 128>}, {transform_indices = @transform_1, window_bounds = array<i64: 1, 4, 128>}, {transform_indices = @transform_2, window_bounds = array<i64: 1, 4, 128>}, {pipeline_mode = #tpu.pipeline_mode<synchronous>, transform_indices = @transform_3, window_bounds = array<i64: 8, 12>}, {transform_indices = @transform_4, window_bounds = array<i64: 1, 1, 8, 2>}]} {
    %c1_i32 = arith.constant 1 : i32
    %0 = arith.muli %arg1, %c1_i32 : i32
    %1 = arith.addi %0, %arg2 : i32
    %c0_i32 = arith.constant 0 : i32
    %2 = arith.cmpi eq, %arg2, %c0_i32 : i32
    %3 = arith.extui %2 : i1 to i32
    %c0_i32_0 = arith.constant 0 : i32
    %4 = arith.cmpi ne, %3, %c0_i32_0 : i32
    scf.if %4 {
      %cst_25 = arith.constant 0.000000e+00 : f32
      %63 = vector.broadcast %cst_25 : f32 to vector<1x1x8x2xf32>
      %c0_26 = arith.constant 0 : index
      %c0_27 = arith.constant 0 : index
      %c0_28 = arith.constant 0 : index
      %c0_29 = arith.constant 0 : index
      %64 = vector.load %arg7[%c0_26, %c0_27, %c0_28, %c0_29] : memref<1x1x8x2xf32, #tpu.memory_space<vmem>>, vector<1x1x8x2xf32>
      tpu.vector_store %arg7[%c0_26, %c0_27, %c0_28, %c0_29], %63 {strides = array<i32>} : memref<1x1x8x2xf32, #tpu.memory_space<vmem>>, vector<1x1x8x2xf32>,
    } else {
    }
    %c0_i32_1 = arith.constant 0 : i32
    %5 = arith.minsi %1, %c0_i32_1 : i32
    %c0 = arith.constant 0 : index
    %c0_2 = arith.constant 0 : index
    %c0_3 = arith.constant 0 : index
    %6 = vector.load %arg3[%c0, %c0_2, %c0_3] : memref<1x4x128xf32, #tpu.memory_space<vmem>>, vector<1x4x128xf32>
    %7 = vector.shape_cast %6 : vector<1x4x128xf32> to vector<4x128xf32>
    %8 = tpu.iota {dimensions = array<i32: 1>} : vector<1x128xi32>
    %c1_i32_4 = arith.constant 1 : i32
    %9 = tpu.dynamic_rotate %7 by %c1_i32_4 dim 1 : vector<4x128xf32>, i32 -> vector<4x128xf32>
    %c0_i32_5 = arith.constant 0 : i32
    %10 = arith.cmpi sgt, %5, %c0_i32_5 : i32
    %c0_6 = arith.constant 0 : index
    %c0_7 = arith.constant 0 : index
    %c127 = arith.constant 127 : index
    %11 = vector.load %arg4[%c0_6, %c0_7, %c127] : memref<1x4x128xf32, #tpu.memory_space<vmem>>, vector<1x4x1xf32>
    %12 = vector.shape_cast %11 : vector<1x4x1xf32> to vector<4x1xf32>
    %cst = arith.constant 0.000000e+00 : f32
    %13 = vector.broadcast %cst : f32 to vector<4x1xf32>
    %14 = arith.select %10, %12, %13 : vector<4x1xf32>
    %c0_i32_8 = arith.constant 0 : i32
    %15 = vector.broadcast %c0_i32_8 : i32 to vector<1x128xi32>
    %16 = arith.cmpi eq, %8, %15 : vector<1x128xi32>
    %17 = vector.shape_cast %16 : vector<1x128xi1> to vector<1x128xi1>
    %18 = vector.broadcast %17 : vector<1x128xi1> to vector<4x128xi1>
    %19 = vector.shape_cast %14 : vector<4x1xf32> to vector<4x1xf32>
    %20 = vector.broadcast %19 : vector<4x1xf32> to vector<4x128xf32>
    %21 = arith.select %18, %20, %9 : vector<4x128xi1>, vector<4x128xf32>
    %c127_i32 = arith.constant 127 : i32
    %22 = tpu.dynamic_rotate %7 by %c127_i32 dim 1 : vector<4x128xf32>, i32 -> vector<4x128xf32>
    %c127_i32_9 = arith.constant 127 : i32
    %23 = vector.broadcast %c127_i32_9 : i32 to vector<1x128xi32>
    %24 = arith.cmpi eq, %8, %23 : vector<1x128xi32>
    %c0_10 = arith.constant 0 : index
    %c0_11 = arith.constant 0 : index
    %c0_12 = arith.constant 0 : index
    %25 = vector.load %arg5[%c0_10, %c0_11, %c0_12] : memref<1x4x128xf32, #tpu.memory_space<vmem>>, vector<1x4x1xf32>
    %26 = vector.shape_cast %25 : vector<1x4x1xf32> to vector<4x1xf32>
    %27 = vector.shape_cast %24 : vector<1x128xi1> to vector<1x128xi1>
    %28 = vector.broadcast %27 : vector<1x128xi1> to vector<4x128xi1>
    %29 = vector.shape_cast %26 : vector<4x1xf32> to vector<4x1xf32>
    %30 = vector.broadcast %29 : vector<4x1xf32> to vector<4x128xf32>
    %31 = arith.select %28, %30, %22 : vector<4x128xi1>, vector<4x128xf32>
    %c128_i32 = arith.constant 128 : i32
    %32 = arith.muli %5, %c128_i32 : i32
    %c16_i32 = arith.constant 16 : i32
    %33 = arith.subi %c16_i32, %32 : i32
    %c1_i32_13 = arith.constant 1 : i32
    %34 = arith.subi %33, %c1_i32_13 : i32
    %35 = vector.broadcast %34 : i32 to vector<1x128xi32>
    %36 = arith.cmpi slt, %8, %35 : vector<1x128xi32>
    %cst_14 = arith.constant 0.000000e+00 : f32
    %37 = vector.shape_cast %36 : vector<1x128xi1> to vector<1x128xi1>
    %38 = vector.broadcast %37 : vector<1x128xi1> to vector<4x128xi1>
    %39 = vector.broadcast %cst_14 : f32 to vector<4x128xf32>
    %40 = arith.select %38, %31, %39 : vector<4x128xi1>, vector<4x128xf32>
    %41 = tpu.concatenate %21, %7, %40 in 0 : vector<4x128xf32>, vector<4x128xf32>, vector<4x128xf32> -> vector<12x128xf32>
    %c0_15 = arith.constant 0 : index
    %c0_16 = arith.constant 0 : index
    %42 = vector.load %arg6[%c0_15, %c0_16] : memref<8x12xf32, #tpu.memory_space<vmem>>, vector<8x12xf32>
    %cst_17 = arith.constant dense<0.000000e+00> : vector<8x128xf32>
    %43 = tpu.matmul %42, %41, %cst_17 {dimension_numbers = #tpu.dot_dimension_numbers<[1], [0], [0], [1], [0, 0, 1, 1], [], []>} : vector<8x12xf32>, vector<12x128xf32>, vector<8x128xf32> -> vector<8x128xf32>
    %44 = tpu.iota {dimensions = array<i32: 1>} : vector<1x128xi32>
    %c128_i32_18 = arith.constant 128 : i32
    %45 = arith.muli %5, %c128_i32_18 : i32
    %46 = vector.broadcast %45 : i32 to vector<1x128xi32>
    %47 = arith.addi %44, %46 : vector<1x128xi32>
    %c16_i32_19 = arith.constant 16 : i32
    %48 = vector.broadcast %c16_i32_19 : i32 to vector<1x128xi32>
    %49 = arith.cmpi slt, %47, %48 : vector<1x128xi32>
    %cst_20 = arith.constant 0.000000e+00 : f32
    %50 = vector.shape_cast %49 : vector<1x128xi1> to vector<1x128xi1>
    %51 = vector.broadcast %50 : vector<1x128xi1> to vector<8x128xi1>
    %52 = vector.broadcast %cst_20 : f32 to vector<8x128xf32>
    %53 = arith.select %51, %43, %52 : vector<8x128xi1>, vector<8x128xf32>
    %cst_21 = arith.constant dense<0.000000e+00> : vector<8xf32>
    %54 = vector.multi_reduction <add>, %53, %cst_21 [1] : vector<8x128xf32> to vector<8xf32>
    %55 = vector.shape_cast %54 : vector<8xf32> to vector<8x1xf32>
    %56 = arith.mulf %53, %53 : vector<8x128xf32>
    %cst_22 = arith.constant dense<0.000000e+00> : vector<8xf32>
    %57 = vector.multi_reduction <add>, %56, %cst_22 [1] : vector<8x128xf32> to vector<8xf32>
    %58 = vector.shape_cast %57 : vector<8xf32> to vector<8x1xf32>
    %59 = tpu.concatenate %55, %58 in 1 : vector<8x1xf32>, vector<8x1xf32> -> vector<8x2xf32>
    %c1_i32_23 = arith.constant 1 : i32
    %60 = arith.cmpi slt, %1, %c1_i32_23 : i32
    %61 = arith.extui %60 : i1 to i32
    %c0_i32_24 = arith.constant 0 : i32
    %62 = arith.cmpi ne, %61, %c0_i32_24 : i32
    scf.if %62 {
      %c0_25 = arith.constant 0 : index
      %c0_26 = arith.constant 0 : index
      %c0_27 = arith.constant 0 : index
      %c0_28 = arith.constant 0 : index
      %63 = vector.load %arg7[%c0_25, %c0_26, %c0_27, %c0_28] : memref<1x1x8x2xf32, #tpu.memory_space<vmem>>, vector<1x1x8x2xf32>
      %64 = vector.shape_cast %63 : vector<1x1x8x2xf32> to vector<8x2xf32>
      %65 = arith.addf %64, %59 : vector<8x2xf32>
      %c0_29 = arith.constant 0 : index
      %c0_30 = arith.constant 0 : index
      %c0_31 = arith.constant 0 : index
      %c0_32 = arith.constant 0 : index
      %66 = vector.load %arg7[%c0_29, %c0_30, %c0_31, %c0_32] : memref<1x1x8x2xf32, #tpu.memory_space<vmem>>, vector<1x1x8x2xf32>
      %67 = vector.shape_cast %66 : vector<1x1x8x2xf32> to vector<8x2xf32>
      %68 = vector.shape_cast %65 : vector<8x2xf32> to vector<1x1x8x2xf32>
      tpu.vector_store %arg7[%c0_29, %c0_30, %c0_31, %c0_32], %68 {strides = array<i32>} : memref<1x1x8x2xf32, #tpu.memory_space<vmem>>, vector<1x1x8x2xf32>,
    } else {
    }
    return
  }
  func.func @transform_0(%arg0: i32, %arg1: i32, %arg2: i32) -> (i32, i32, i32) {
    %c1_i32 = arith.constant 1 : i32
    %0 = arith.muli %arg1, %c1_i32 : i32
    %1 = arith.addi %0, %arg2 : i32
    %c0_i32 = arith.constant 0 : i32
    %2 = arith.minsi %1, %c0_i32 : i32
    %c0_i32_0 = arith.constant 0 : i32
    %c0_i32_1 = arith.constant 0 : i32
    return %arg0, %c0_i32_0, %2 : i32, i32, i32
  }
  func.func @transform_1(%arg0: i32, %arg1: i32, %arg2: i32) -> (i32, i32, i32) {
    %c1_i32 = arith.constant 1 : i32
    %0 = arith.muli %arg1, %c1_i32 : i32
    %1 = arith.addi %0, %arg2 : i32
    %c0_i32 = arith.constant 0 : i32
    %2 = arith.minsi %1, %c0_i32 : i32
    %c1_i32_0 = arith.constant 1 : i32
    %3 = arith.muli %2, %c1_i32_0 : i32
    %c1_i32_1 = arith.constant 1 : i32
    %4 = arith.subi %3, %c1_i32_1 : i32
    %c0_i32_2 = arith.constant 0 : i32
    %5 = arith.maxsi %4, %c0_i32_2 : i32
    %c0_i32_3 = arith.constant 0 : i32
    %c0_i32_4 = arith.constant 0 : i32
    return %arg0, %c0_i32_3, %5 : i32, i32, i32
  }
  func.func @transform_2(%arg0: i32, %arg1: i32, %arg2: i32) -> (i32, i32, i32) {
    %c1_i32 = arith.constant 1 : i32
    %0 = arith.muli %arg1, %c1_i32 : i32
    %1 = arith.addi %0, %arg2 : i32
    %c0_i32 = arith.constant 0 : i32
    %2 = arith.minsi %1, %c0_i32 : i32
    %c1_i32_0 = arith.constant 1 : i32
    %3 = arith.addi %2, %c1_i32_0 : i32
    %c1_i32_1 = arith.constant 1 : i32
    %4 = arith.muli %3, %c1_i32_1 : i32
    %c0_i32_2 = arith.constant 0 : i32
    %5 = arith.minsi %4, %c0_i32_2 : i32
    %c0_i32_3 = arith.constant 0 : i32
    %c0_i32_4 = arith.constant 0 : i32
    return %arg0, %c0_i32_3, %5 : i32, i32, i32
  }
  func.func @transform_3(%arg0: i32, %arg1: i32, %arg2: i32) -> (i32, i32) {
    %c0_i32 = arith.constant 0 : i32
    %c0_i32_0 = arith.constant 0 : i32
    %c0_i32_1 = arith.constant 0 : i32
    return %c0_i32, %c0_i32_0 : i32, i32
  }
  func.func @transform_4(%arg0: i32, %arg1: i32, %arg2: i32) -> (i32, i32, i32, i32) {
    %c0_i32 = arith.constant 0 : i32
    %c0_i32_0 = arith.constant 0 : i32
    %c0_i32_1 = arith.constant 0 : i32
    return %arg0, %arg1, %c0_i32, %c0_i32_0 : i32, i32, i32, i32
  }
}

</mosaic_0001>

<llo_original>
// kernel: tpu_custom_call.1
$region0: #{tpu_custom_call.1}
  #allocation0 [shape = 'u32[]', space=smem, size = 0x4, offset = 0x4, fixed_abs, tag = 'smem constant byte address 0x4 - core index']
  #allocation1 [shape = 'u32[144,128]{1,0:T(1,128)}', space=vmem, size = 0x12000, scoped, tag = 'internal scratch']
  %s0 = inlined_call_operand.hbm [shape: f32[2,4,16], index: 0, kind: input, shape index: {}]
  %s1 = inlined_call_operand.hbm [shape: f32[2,4,16], index: 1, kind: input, shape index: {}]
  %s2 = inlined_call_operand.hbm [shape: f32[2,4,16], index: 2, kind: input, shape index: {}]
  %s3 = inlined_call_operand.vmem [shape: f32[8,12], index: 3, kind: input, shape index: {}]
  %s4 = inlined_call_operand.vmem [shape: f32[2,1,8,2], index: 4, kind: output, shape index: {}]
  %s5 = sld [smem:[#allocation0]]
  $region69: #{tpu_custom_call.1} parent=0
    _
  %s7 = ssub.s32 1, %s5
  %s8 = scalar_select 0, %s7, %s5
  $region1: #{tpu_custom_call.1} parent=0
    #allocation2 [shape = 'u8[4096]{0}', space=vmem, size = 0x1000, scoped, tag = 'input window, operand 0']
    #allocation3 [shape = 's32[2]{0}', space=sflag, size = 0x8, scoped, tag = 'scoped memory for tpu_custom_call.1']
    #allocation4 [shape = 'u8[4096]{0}', space=vmem, size = 0x1000, scoped, tag = 'input window, operand 1']
    #allocation5 [shape = 's32[2]{0}', space=sflag, size = 0x8, scoped, tag = 'scoped memory for tpu_custom_call.1']
    #allocation6 [shape = 'u8[4096]{0}', space=vmem, size = 0x1000, scoped, tag = 'input window, operand 2']
    %9 = vsyncpa [#allocation3], 0
    %s10 = scalar_lea.sflag [#allocation3], 1
    %11 = vsyncpa %s10, 0
    %12 = vsyncpa [#allocation5], 0
    %s13 = scalar_lea.sflag [#allocation5], 1
    %14 = vsyncpa %s13, 0
    loop: start=0, step=1, limit=4
    $region2: #{tpu_custom_call.1} parent=1 // loop_pre_header
      _
    $region3: #{tpu_custom_call.1} parent=1 // loop_header
      %s16 = sphi 0, %s20
      %p17 = scmp.ge.s32.totalorder %s16, 4
      %s23 = sphi 0, %s42
      %s24 = sphi 0, %s38
      %s25 = sphi 0, %s34
      %s26 = sphi 0, %s23
      %s27 = sphi 0, %s24
      %s28 = sphi 0, %s25
      %s29 = sphi 0, %s26
      %s30 = sphi 0, %s27
      %s31 = sphi 0, %s28
      %s53 = sphi 0, %s55
      %s56 = sphi 0, %s53
      %s57 = sphi 0, %s56
      %s73 = sphi 0, %s57
      %s93 = sphi 0, %s95
      %s96 = sphi 0, %s93
      %s97 = sphi 0, %s96
      %s113 = sphi 0, %s97
      %s133 = sphi 0, %s135
      %s136 = sphi 0, %s133
      %s137 = sphi 0, %s136
      %s153 = sphi 0, %s137
      %s157 = sphi 0, %s157
      %s159 = sphi 0, %s157
      %s160 = sphi 0, %s159
      %s174 = sphi 0, %s160
      %s182 = sphi 0, %s184
      %s185 = sphi 0, %s182
      %s186 = sphi 0, %s185
      %s202 = sphi 0, %s186
    $region4: #{tpu_custom_call.1} parent=1 // loop_header_branch
      %19 = sbr.rel (%p17) target = $region8
    $region5: #{tpu_custom_call.1} parent=1 // loop_body
      %s21 = ssub.s32 %s16, 1
      %s22 = ssub.s32 %s16, 2
      %s32 = sadd.s32 1, %s25
      %p33 = scmp.ge.s32.totalorder %s32, 1
      %s34 = scalar_select %p33, 0, %s32
      %s35 = sadd.s32 1, %s24
      %s36 = scalar_select %p33, %s35, %s24
      %p37 = scmp.ge.s32.totalorder %s36, 1
      %s38 = scalar_select %p37, 0, %s36
      %s39 = sadd.s32 1, %s23
      %s40 = scalar_select %p37, %s39, %s23
      %p41 = scmp.ge.s32.totalorder %s40, 2
      %s42 = scalar_select %p41, 0, %s40
      %s43 = sadd.s32 %s24, %s25
      %p44 = scmp.lt.s32.totalorder %s43, 0
      %s45 = scalar_select %p44, %s43, 0
      %s46 = sadd.s32 %s38, %s34
      %p47 = scmp.lt.s32.totalorder %s46, 0
      %s48 = scalar_select %p47, %s46, 0
      %s49 = ssub.s32 %s23, %s42
      %s50 = ssub.s32 %s45, %s48
      %s51 = sor.u32 %s49, %s50
      %p52 = scmp.eq.s32.totalorder %s51, 0
      %s54 = sadd.s32 %s53, 1
      %s55 = scalar_select %p52, %s53, %s54
      %p58 = pneg %p52
      %p59 = scmp.eq.s32.totalorder %s16, 1
      %p60 = por %p58, %p59
      %p61 = scmp.ne.s32.totalorder %s53, %s56
      %p62 = scmp.eq.s32.totalorder %s16, 0
      %p63 = por %p61, %p62
      %p64 = scmp.ne.s32.totalorder %s53, %s56
      %p65 = scmp.eq.s32.totalorder %s21, 1
      %p66 = por %p64, %p65
      %p67 = scmp.ne.s32.totalorder %s56, %s57
      %p68 = scmp.eq.s32.totalorder %s21, 0
      %p69 = por %p67, %p68
      %p70 = scmp.ne.s32.totalorder %s56, %s57
      %p71 = scmp.eq.s32.totalorder %s22, 1
      %p72 = por %p70, %p71
      %p74 = scmp.ne.s32.totalorder %s57, %s73
      %p75 = scmp.eq.s32.totalorder %s22, 0
      %p76 = por %p74, %p75
      %s77 = sadd.s32 %s24, %s25
      %p78 = scmp.lt.s32.totalorder %s77, 0
      %s79 = scalar_select %p78, %s77, 0
      %s80 = ssub.s32 %s79, 1
      %p81 = scmp.gt.s32.totalorder %s80, 0
      %s82 = scalar_select %p81, %s80, 0
      %s83 = sadd.s32 %s38, %s34
      %p84 = scmp.lt.s32.totalorder %s83, 0
      %s85 = scalar_select %p84, %s83, 0
      %s86 = ssub.s32 %s85, 1
      %p87 = scmp.gt.s32.totalorder %s86, 0
      %s88 = scalar_select %p87, %s86, 0
      %s89 = ssub.s32 %s23, %s42
      %s90 = ssub.s32 %s82, %s88
      %s91 = sor.u32 %s89, %s90
      %p92 = scmp.eq.s32.totalorder %s91, 0
      %s94 = sadd.s32 %s93, 1
      %s95 = scalar_select %p92, %s93, %s94
      %p98 = pneg %p92
      %p99 = scmp.eq.s32.totalorder %s16, 1
      %p100 = por %p98, %p99
      %p101 = scmp.ne.s32.totalorder %s93, %s96
      %p102 = scmp.eq.s32.totalorder %s16, 0
      %p103 = por %p101, %p102
      %p104 = scmp.ne.s32.totalorder %s93, %s96
      %p105 = scmp.eq.s32.totalorder %s21, 1
      %p106 = por %p104, %p105
      %p107 = scmp.ne.s32.totalorder %s96, %s97
      %p108 = scmp.eq.s32.totalorder %s21, 0
      %p109 = por %p107, %p108
      %p110 = scmp.ne.s32.totalorder %s96, %s97
      %p111 = scmp.eq.s32.totalorder %s22, 1
      %p112 = por %p110, %p111
      %p114 = scmp.ne.s32.totalorder %s97, %s113
      %p115 = scmp.eq.s32.totalorder %s22, 0
      %p116 = por %p114, %p115
      %s117 = sadd.s32 %s24, %s25
      %p118 = scmp.lt.s32.totalorder %s117, 0
      %s119 = scalar_select %p118, %s117, 0
      %s120 = sadd.s32 %s119, 1
      %p121 = scmp.lt.s32.totalorder %s120, 0
      %s122 = scalar_select %p121, %s120, 0
      %s123 = sadd.s32 %s38, %s34
      %p124 = scmp.lt.s32.totalorder %s123, 0
      %s125 = scalar_select %p124, %s123, 0
      %s126 = sadd.s32 %s125, 1
      %p127 = scmp.lt.s32.totalorder %s126, 0
      %s128 = scalar_select %p127, %s126, 0
      %s129 = ssub.s32 %s23, %s42
      %s130 = ssub.s32 %s122, %s128
      %s131 = sor.u32 %s129, %s130
      %p132 = scmp.eq.s32.totalorder %s131, 0
      %s134 = sadd.s32 %s133, 1
      %s135 = scalar_select %p132, %s133, %s134
      %p138 = pneg %p132
      %p139 = scmp.eq.s32.totalorder %s16, 1
      %p140 = por %p138, %p139
      %p141 = scmp.ne.s32.totalorder %s133, %s136
      %p142 = scmp.eq.s32.totalorder %s16, 0
      %p143 = por %p141, %p142
      %p144 = scmp.ne.s32.totalorder %s133, %s136
      %p145 = scmp.eq.s32.totalorder %s21, 1
      %p146 = por %p144, %p145
      %p147 = scmp.ne.s32.totalorder %s136, %s137
      %p148 = scmp.eq.s32.totalorder %s21, 0
      %p149 = por %p147, %p148
      %p150 = scmp.ne.s32.totalorder %s136, %s137
      %p151 = scmp.eq.s32.totalorder %s22, 1
      %p152 = por %p150, %p151
      %p154 = scmp.ne.s32.totalorder %s137, %s153
      %p155 = scmp.eq.s32.totalorder %s22, 0
      %p156 = por %p154, %p155
      %s158 = sadd.s32 %s157, 1
      %p161 = scmp.eq.s32.totalorder %s16, 1
      %p162 = scmp.ne.s32.totalorder %s157, %s159
      %p163 = scmp.eq.s32.totalorder %s16, 0
      %p164 = por %p162, %p163
      %p165 = scmp.ne.s32.totalorder %s157, %s159
      %p166 = scmp.eq.s32.totalorder %s21, 1
      %p167 = por %p165, %p166
      %p168 = scmp.ne.s32.totalorder %s159, %s160
      %p169 = scmp.eq.s32.totalorder %s21, 0
      %p170 = por %p168, %p169
      %p171 = scmp.ne.s32.totalorder %s159, %s160
      %p172 = scmp.eq.s32.totalorder %s22, 1
      %p173 = por %p171, %p172
      %p175 = scmp.ne.s32.totalorder %s160, %s174
      %p176 = scmp.eq.s32.totalorder %s22, 0
      %p177 = por %p175, %p176
      %s178 = ssub.s32 %s23, %s42
      %s179 = ssub.s32 %s24, %s38
      %s180 = sor.u32 %s178, %s179
      %p181 = scmp.eq.s32.totalorder %s180, 0
      %s183 = sadd.s32 %s182, 1
      %s184 = scalar_select %p181, %s182, %s183
      %p187 = pneg %p181
      %p188 = scmp.eq.s32.totalorder %s16, 1
      %p189 = por %p187, %p188
      %p190 = scmp.ne.s32.totalorder %s182, %s185
      %p191 = scmp.eq.s32.totalorder %s16, 0
      %p192 = por %p190, %p191
      %p193 = scmp.ne.s32.totalorder %s182, %s185
      %p194 = scmp.eq.s32.totalorder %s21, 1
      %p195 = por %p193, %p194
      %p196 = scmp.ne.s32.totalorder %s185, %s186
      %p197 = scmp.eq.s32.totalorder %s21, 0
      %p198 = por %p196, %p197
      %p199 = scmp.ne.s32.totalorder %s185, %s186
      %p200 = scmp.eq.s32.totalorder %s22, 1
      %p201 = por %p199, %p200
      %p203 = scmp.ne.s32.totalorder %s186, %s202
      %p204 = scmp.eq.s32.totalorder %s22, 0
      %p205 = por %p203, %p204
      %p206 = scmp.le.s32.totalorder 1, %s16
      %p207 = scmp.lt.s32.totalorder %s16, 3
      %p208 = pnand %p206, %p207
      %p209 = pneg %p208
      // Predicated region
      $region9: #{tpu_custom_call.1} parent=5 // pred_check
        _
      $region10: #{tpu_custom_call.1} parent=5 // pred_check_branch
        %211 = sbr.rel (%p208) target = $region12
      $region11: #{tpu_custom_call.1} parent=5 // pred_region
        %s212 = ssub.s32 %s16, 1
        // Predicated region
        $region13: #{tpu_custom_call.1} parent=11 // pred_check
          %p213 = pneg %p170
        $region14: #{tpu_custom_call.1} parent=11 // pred_check_branch
          %215 = sbr.rel (%p213) target = $region16
        $region15: #{tpu_custom_call.1} parent=11 // pred_region
          _
        $region16: #{tpu_custom_call.1} parent=11 // pred_fallthru
          _
      $region12: #{tpu_custom_call.1} parent=5 // pred_fallthru
        _
      %p216 = scmp.lt.s32.totalorder %s16, 2
      // Predicated region
      $region17: #{tpu_custom_call.1} parent=5 // pred_check
        %p217 = pneg %p216
      $region18: #{tpu_custom_call.1} parent=5 // pred_check_branch
        %219 = sbr.rel (%p217) target = $region20
      $region19: #{tpu_custom_call.1} parent=5 // pred_region
        // Predicated region
        $region21: #{tpu_custom_call.1} parent=19 // pred_check
          %p220 = pneg %p63
        $region22: #{tpu_custom_call.1} parent=19 // pred_check_branch
          %222 = sbr.rel (%p220) target = $region24
        $region23: #{tpu_custom_call.1} parent=19 // pred_region
          %s223 = sand.u32 %s53, 1
          %s224 = scalar_lea.sflag [#allocation3], %s223
          %s225 = sand.u32 %s53, 1
          %s226 = smul.addr %s225, 4
          %s227 = scalar_lea.vmem [#allocation2], %s226
          %s228 = sadd.s32 %s24, %s25
          %p229 = scmp.lt.s32.totalorder %s228, 0
          %s230 = scalar_select %p229, %s228, 0
          %s232 = ssub.s32 64, 64
          %233 = vsyncadd %s224, %s232
          %s234 = sadd.s32 %s230, %s23
          %s235 = smul.addr %s234, 64
          %s236 = scalar_lea.hbm %s0, %s235
          %s238 = sshll.u32 %s227, 4
          %s239 = int_to_ptr.vmem [resolvable:$true] %s238
          %241 = dma.hbm_to_vmem [thread:$0]  %s236, 64, %s239, %s224
        $region24: #{tpu_custom_call.1} parent=19 // pred_fallthru
          _
        // Predicated region
        $region25: #{tpu_custom_call.1} parent=19 // pred_check
          %p242 = pneg %p103
        $region26: #{tpu_custom_call.1} parent=19 // pred_check_branch
          %244 = sbr.rel (%p242) target = $region28
        $region27: #{tpu_custom_call.1} parent=19 // pred_region
          %s245 = sand.u32 %s16, 1
          %s246 = scalar_lea.sflag [#allocation5], %s245
          %s247 = sand.u32 %s93, 1
          %s248 = smul.addr %s247, 4
          %s249 = scalar_lea.vmem [#allocation4], %s248
          %s250 = sadd.s32 %s24, %s25
          %p251 = scmp.lt.s32.totalorder %s250, 0
          %s252 = scalar_select %p251, %s250, 0
          %s253 = ssub.s32 %s252, 1
          %p254 = scmp.gt.s32.totalorder %s253, 0
          %s255 = scalar_select %p254, %s253, 0
          %s257 = ssub.s32 64, 64
          %258 = vsyncadd %s246, %s257
          %s259 = sadd.s32 %s255, %s23
          %s260 = smul.addr %s259, 64
          %s261 = scalar_lea.hbm %s1, %s260
          %s263 = sshll.u32 %s249, 4
          %s264 = int_to_ptr.vmem [resolvable:$true] %s263
          %266 = dma.hbm_to_vmem [thread:$0]  %s261, 64, %s264, %s246
        $region28: #{tpu_custom_call.1} parent=19 // pred_fallthru
          _
        // Predicated region
        $region29: #{tpu_custom_call.1} parent=19 // pred_check
          %p267 = pneg %p143
        $region30: #{tpu_custom_call.1} parent=19 // pred_check_branch
          %269 = sbr.rel (%p267) target = $region32
        $region31: #{tpu_custom_call.1} parent=19 // pred_region
          %s270 = sand.u32 %s16, 1
          %s271 = scalar_lea.sflag [#allocation5], %s270
          %s272 = sand.u32 %s133, 1
          %s273 = smul.addr %s272, 4
          %s274 = scalar_lea.vmem [#allocation6], %s273
          %s275 = sadd.s32 %s24, %s25
          %p276 = scmp.lt.s32.totalorder %s275, 0
          %s277 = scalar_select %p276, %s275, 0
          %s278 = sadd.s32 %s277, 1
          %p279 = scmp.lt.s32.totalorder %s278, 0
          %s280 = scalar_select %p279, %s278, 0
          %s282 = ssub.s32 64, 64
          %283 = vsyncadd %s271, %s282
          %s284 = sadd.s32 %s280, %s23
          %s285 = smul.addr %s284, 64
          %s286 = scalar_lea.hbm %s2, %s285
          %s288 = sshll.u32 %s274, 4
          %s289 = int_to_ptr.vmem [resolvable:$true] %s288
          %291 = dma.hbm_to_vmem [thread:$0]  %s286, 64, %s289, %s271
        $region32: #{tpu_custom_call.1} parent=19 // pred_fallthru
          _
      $region20: #{tpu_custom_call.1} parent=5 // pred_fallthru
        _
      %p292 = scmp.le.s32.totalorder 1, %s16
      %p293 = scmp.lt.s32.totalorder %s16, 3
      %p294 = pnand %p292, %p293
      %p295 = pneg %p294
      // Predicated region
      $region33: #{tpu_custom_call.1} parent=5 // pred_check
        _
      $region34: #{tpu_custom_call.1} parent=5 // pred_check_branch
        %297 = sbr.rel (%p294) target = $region36
      $region35: #{tpu_custom_call.1} parent=5 // pred_region
        %s298 = ssub.s32 %s16, 1
        %s299 = sand.u32 %s56, 1
        %s300 = scalar_lea.sflag [#allocation3], %s299
        %s301 = sand.u32 %s56, 1
        %s302 = smul.addr %s301, 4
        %s303 = scalar_lea.vmem [#allocation2], %s302
        // Predicated region
        $region37: #{tpu_custom_call.1} parent=35 // pred_check
          %p304 = pneg %p69
        $region38: #{tpu_custom_call.1} parent=35 // pred_check_branch
          %306 = sbr.rel (%p304) target = $region40
        $region39: #{tpu_custom_call.1} parent=35 // pred_region
          %307 = dma.done %s300, 64
        $region40: #{tpu_custom_call.1} parent=35 // pred_fallthru
          _
        %s308 = sand.u32 %s21, 1
        %s309 = scalar_lea.sflag [#allocation5], %s308
        %s310 = sand.u32 %s96, 1
        %s311 = smul.addr %s310, 4
        %s312 = scalar_lea.vmem [#allocation4], %s311
        // Predicated region
        $region41: #{tpu_custom_call.1} parent=35 // pred_check
          %p313 = pneg %p109
        $region42: #{tpu_custom_call.1} parent=35 // pred_check_branch
          %315 = sbr.rel (%p313) target = $region44
        $region43: #{tpu_custom_call.1} parent=35 // pred_region
          %316 = dma.done %s309, 64
        $region44: #{tpu_custom_call.1} parent=35 // pred_fallthru
          _
        %s317 = sand.u32 %s21, 1
        %s318 = scalar_lea.sflag [#allocation5], %s317
        %s319 = sand.u32 %s136, 1
        %s320 = smul.addr %s319, 4
        %s321 = scalar_lea.vmem [#allocation6], %s320
        // Predicated region
        $region45: #{tpu_custom_call.1} parent=35 // pred_check
          %p322 = pneg %p149
        $region46: #{tpu_custom_call.1} parent=35 // pred_check_branch
          %324 = sbr.rel (%p322) target = $region48
        $region47: #{tpu_custom_call.1} parent=35 // pred_region
          %325 = dma.done %s318, 64
        $region48: #{tpu_custom_call.1} parent=35 // pred_fallthru
          _
        %s326 = sand.u32 %s56, 1
        %s327 = scalar_lea.sflag [#allocation3], %s326
        %s328 = sand.u32 %s56, 1
        %s329 = smul.addr %s328, 4
        %s330 = scalar_lea.vmem [#allocation2], %s329
        %p331 = pneg %p69
        %p332 = pneg %p66
        %s333 = sand.u32 %s21, 1
        %s334 = scalar_lea.sflag [#allocation5], %s333
        %s335 = sand.u32 %s96, 1
        %s336 = smul.addr %s335, 4
        %s337 = scalar_lea.vmem [#allocation4], %s336
        %p338 = pneg %p109
        %p339 = pneg %p106
        %s340 = sand.u32 %s21, 1
        %s341 = scalar_lea.sflag [#allocation5], %s340
        %s342 = sand.u32 %s136, 1
        %s343 = smul.addr %s342, 4
        %s344 = scalar_lea.vmem [#allocation6], %s343
        %p345 = pneg %p149
        %p346 = pneg %p146
        %p347 = pneg %p170
        %p348 = pneg %p167
        %p349 = pneg %p198
        %p350 = pneg %p195
        %p351 = scmp.lt.s32.totalorder %s26, 1
        %s352 = scalar_select %p351, %s26, 1
        %p353 = scmp.lt.s32.totalorder %s27, 0
        %s354 = scalar_select %p353, %s27, 0
        %s355 = sadd.s32 %s354, %s352
        %s356 = smul.addr %s355, 8
        %s357 = scalar_lea.vmem %s4, %s356
        %s358 = sadd.s32 %s27, %s28
        %p359 = scmp.lt.s32.totalorder %s358, 0
        %s360 = scalar_select %p359, %s358, 0
        %s361 = sadd.s32 %s27, %s28
        %p362 = scmp.lt.s32.totalorder %s361, 0
        %s363 = scalar_select %p362, %s361, 0
        %s364 = ssub.s32 %s363, 1
        %p365 = scmp.gt.s32.totalorder %s364, 0
        %s366 = scalar_select %p365, %s364, 0
        %s367 = sadd.s32 %s27, %s28
        %p368 = scmp.lt.s32.totalorder %s367, 0
        %s369 = scalar_select %p368, %s367, 0
        %s370 = sadd.s32 %s369, 1
        %p371 = scmp.lt.s32.totalorder %s370, 0
        %s372 = scalar_select %p371, %s370, 0
        %p373 = scmp.lt.s32.totalorder %s26, 1
        %s374 = scalar_select %p373, %s26, 1
        %p375 = scmp.lt.s32.totalorder %s27, 0
        %s376 = scalar_select %p375, %s27, 0
        %s377 = sadd.s32 %s376, %s374
        %s378 = smul.addr %s377, 8
        %s379 = scalar_lea.vmem %s4, %s378
        %s380 = sadd.s32 %s27, %s28
        %p381 = scmp.eq.s32.totalorder %s28, 0
        // Predicated region
        $region49: #{tpu_custom_call.1} parent=35 // pred_check
          %p382 = pneg %p381
        $region50: #{tpu_custom_call.1} parent=35 // pred_check_branch
          %384 = sbr.rel (%p382) target = $region52
        $region51: #{tpu_custom_call.1} parent=35 // pred_region
          %vm385 = vcmask 15360
          %386 = vst.msk [vmem:[%s379] sm:$0xff] %vm385, 0.0
        $region52: #{tpu_custom_call.1} parent=35 // pred_fallthru
          _
        %p387 = scmp.lt.s32.totalorder %s380, 0
        %s388 = scalar_select %p387, %s380, 0
        %v389 = vld [vmem:[%s303] sm:$0xf]
        %v390 = vlaneseq
        %v391 = vand.u32 %v390, 127
        %392 = vrot.lane.b32.xlu0 %v389, 1
        %v393 = vpop.permute.xlu0 %392
        %p394 = scmp.gt.s32.totalorder %s388, 0
        %v395 = vld [vmem:[%s312] sm:$0xf]
        %s396 = scalar_select %p394, 1, 0
        %v397 = vstv %s396
        %vm398 = vcmp.eq.s32.totalorder %v397, 1
        %v399 = vsel %vm398, %v395, 0.0
        %vm400 = vcmp.eq.s32.totalorder %v391, 0
        %v401 = vsel %vm400, 1, 0
        %vm402 = vcmp.eq.s32.totalorder %v401, 1
        %404 = vset.pattern.permute.xlu0 127
        %405 = vperm.xlu0 %404, %v399
        %v406 = vpop.permute.xlu0 %405
        %v408 = vsel %vm402, %v406, %v393
        %409 = vrot.lane.b32.xlu0 %v389, 127
        %v410 = vpop.permute.xlu0 %409
        %vm411 = vcmp.eq.s32.totalorder %v391, 127
        %v412 = vld [vmem:[%s321] sm:$0xf]
        %v413 = vsel %vm411, 1, 0
        %vm414 = vcmp.eq.s32.totalorder %v413, 1
        %416 = vset.pattern.permute.xlu0 0
        %417 = vperm.xlu0 %416, %v412
        %v418 = vpop.permute.xlu0 %417
        %v420 = vsel %vm414, %v418, %v410
        %s421 = smul.u32 %s388, 128
        %s422 = ssub.s32 15, %s421
        %v423 = vstv %s422
        %vm424 = vcmp.lt.s32.totalorder %v391, %v423
        %v425 = vsel %vm424, 1, 0
        %vm426 = vcmp.eq.s32.totalorder %v425, 1
        %v427 = vsel %vm426, %v420, 0.0
        %v429 = vrot.slane %v389, 4
        %vm431 = vcmask 1043456
        %v432 = vsel %vm431, %v408, %v429
        %v433 = vld [vmem:[%s3] sm:$0xff]
        %vm434 = vcmask 97280
        %v436 = vsel %vm434, %v433, 0
        %v439 = vsel %vm431, %v427, 0
        %441 = vmatprep.subr.mxu0 0.0
        %442 = vmatpush1.msra.mxu0 %v432
        %443 = vmatprep.subr.mxu0 0.0
        %444 = vmatpush1.msra.mxu0 %v439
        %445 = vmatprep.subr.mxu0 0.0
        %446 = vmatpush1.msra.mxu0 0.0
        %447 = vmatprep.subr.mxu0 0.0
        %448 = vmatpush1.msra.mxu0 0.0
        %449 = vmatprep.subr.mxu0 0.0
        %450 = vmatpush1.msra.mxu0 0.0
        %451 = vmatprep.subr.mxu0 0.0
        %452 = vmatpush1.msra.mxu0 0.0
        %453 = vmatprep.subr.mxu0 0.0
        %454 = vmatpush1.msra.mxu0 0.0
        %455 = vmatprep.subr.mxu0 0.0
        %456 = vmatpush1.msra.mxu0 0.0
        %457 = vmatprep.subr.mxu0 0.0
        %458 = vmatpush1.msra.mxu0 0.0
        %459 = vmatprep.subr.mxu0 0.0
        %460 = vmatpush1.msra.mxu0 0.0
        %461 = vmatprep.subr.mxu0 0.0
        %462 = vmatpush1.msra.mxu0 0.0
        %463 = vmatprep.subr.mxu0 0.0
        %464 = vmatpush1.msra.mxu0 0.0
        %465 = vmatprep.subr.mxu0 0.0
        %466 = vmatpush1.msra.mxu0 0.0
        %467 = vmatprep.subr.mxu0 0.0
        %468 = vmatpush1.msra.mxu0 0.0
        %469 = vmatprep.subr.mxu0 0.0
        %470 = vmatpush1.msra.mxu0 0.0
        %471 = vmatprep.subr.mxu0 0.0
        %472 = vmatpush1.msra.mxu0 0.0
        %473 = vmatprep.subr.mxu0 0.0
        %474 = vmatpush1.msra.mxu0 0.0
        %475 = vmatprep.subr.mxu0 0.0
        %476 = vmatpush1.msra.mxu0 0.0
        %477 = vmatprep.subr.mxu0 0.0
        %478 = vmatpush1.msra.mxu0 0.0
        %479 = vmatprep.subr.mxu0 0.0
        %480 = vmatpush1.msra.mxu0 0.0
        %481 = vmatprep.subr.mxu0 0.0
        %482 = vmatpush1.msra.mxu0 0.0
        %483 = vmatprep.subr.mxu0 0.0
        %484 = vmatpush1.msra.mxu0 0.0
        %485 = vmatprep.subr.mxu0 0.0
        %486 = vmatpush1.msra.mxu0 0.0
        %487 = vmatprep.subr.mxu0 0.0
        %488 = vmatpush1.msra.mxu0 0.0
        %489 = vmatprep.subr.mxu0 0.0
        %490 = vmatpush1.msra.mxu0 0.0
        %491 = vmatprep.subr.mxu0 0.0
        %492 = vmatpush1.msra.mxu0 0.0
        %493 = vmatprep.subr.mxu0 0.0
        %494 = vmatpush1.msra.mxu0 0.0
        %495 = vmatprep.subr.mxu0 0.0
        %496 = vmatpush1.msra.mxu0 0.0
        %497 = vmatprep.subr.mxu0 0.0
        %498 = vmatpush1.msra.mxu0 0.0
        %499 = vmatprep.subr.mxu0 0.0
        %500 = vmatpush1.msra.mxu0 0.0
        %501 = vmatprep.subr.mxu0 0.0
        %502 = vmatpush1.msra.mxu0 0.0
        %503 = vmatprep.subr.mxu0 0.0
        %504 = vmatpush1.msra.mxu0 0.0
        %505 = vmatprep.mubr.f32.mxu0 0.0
        %506 = vmatmul.mubr.f32.gmra.mrb[0].mxu0 %v436
        %v507 = vpop.f32.mrb[0].mxu0
        %v508 = vadd.f32 0.0, %v507
        %v509 = vpop.f32.mrb[0].mxu0
        %510 = vdwg.mxu0
        %v511 = vstv %s421
        %v512 = vadd.s32 %v391, %v511
        %vm513 = vcmp.lt.s32.totalorder %v512, 16
        %v514 = vsel %vm513, 1, 0
        %vm515 = vcmp.eq.s32.totalorder %v514, 1
        %v516 = vsel %vm515, %v508, 0.0
        %517 = vadd.xlane.f32.xlu0 %v516
        %v518 = vpop.xlane.xlu0 %517
        %v519 = vmul.f32 %v516, %v516
        %520 = vadd.xlane.f32.xlu0 %v519
        %v521 = vpop.xlane.xlu0 %520
        %vm522 = vcmask 7168
        %v523 = vsel %vm522, %v518, %v521
        %p524 = scmp.lt.s32.totalorder %s380, 1
        // Predicated region
        $region53: #{tpu_custom_call.1} parent=35 // pred_check
          %p525 = pneg %p524
        $region54: #{tpu_custom_call.1} parent=35 // pred_check_branch
          %527 = sbr.rel (%p525) target = $region56
        $region55: #{tpu_custom_call.1} parent=35 // pred_region
          %v528 = vld [vmem:[%s379] sm:$0xff]
          %v529 = vadd.f32 %v528, %v523
          %vm530 = vcmask 15360
          %531 = vst.msk [vmem:[%s379] sm:$0xff] %vm530, %v529
        $region56: #{tpu_custom_call.1} parent=35 // pred_fallthru
          _
        %p532 = scmp.lt.s32.totalorder %s26, 1
        %s533 = scalar_select %p532, %s26, 1
        %p534 = scmp.lt.s32.totalorder %s27, 0
        %s535 = scalar_select %p534, %s27, 0
        %s536 = sadd.s32 %s535, %s533
        %s537 = smul.addr %s536, 8
        %s538 = scalar_lea.vmem %s4, %s537
        // Predicated region
        $region57: #{tpu_custom_call.1} parent=35 // pred_check
          %p539 = pneg %p195
        $region58: #{tpu_custom_call.1} parent=35 // pred_check_branch
          %541 = sbr.rel (%p539) target = $region60
        $region59: #{tpu_custom_call.1} parent=35 // pred_region
          _
        $region60: #{tpu_custom_call.1} parent=35 // pred_fallthru
          _
      $region36: #{tpu_custom_call.1} parent=5 // pred_fallthru
        _
      %p542 = scmp.le.s32.totalorder 2, %s16
      // Predicated region
      $region61: #{tpu_custom_call.1} parent=5 // pred_check
        %p543 = pneg %p542
      $region62: #{tpu_custom_call.1} parent=5 // pred_check_branch
        %545 = sbr.rel (%p543) target = $region64
      $region63: #{tpu_custom_call.1} parent=5 // pred_region
        %s546 = ssub.s32 %s16, 2
        // Predicated region
        $region65: #{tpu_custom_call.1} parent=63 // pred_check
          %p547 = pneg %p201
        $region66: #{tpu_custom_call.1} parent=63 // pred_check_branch
          %549 = sbr.rel (%p547) target = $region68
        $region67: #{tpu_custom_call.1} parent=63 // pred_region
          %p550 = scmp.lt.s32.totalorder %s29, 1
          %s551 = scalar_select %p550, %s29, 1
          %p552 = scmp.lt.s32.totalorder %s30, 0
          %s553 = scalar_select %p552, %s30, 0
          %s554 = sadd.s32 %s553, %s551
          %s555 = smul.addr %s554, 8
          %s556 = scalar_lea.vmem %s4, %s555
        $region68: #{tpu_custom_call.1} parent=63 // pred_fallthru
          _
      $region64: #{tpu_custom_call.1} parent=5 // pred_fallthru
        _
    $region6: #{tpu_custom_call.1} parent=1 // loop_footer
      %s20 = sadd.s32 1, %s16
    $region7: #{tpu_custom_call.1} parent=1 // loop_footer_branch
      %15 = sbr.rel target = $region3
    $region8: #{tpu_custom_call.1} parent=1 // loop_exit
      _
    %557 = vsyncpa [#allocation3], 1
    %s558 = scalar_lea.sflag [#allocation3], 1
    %559 = vsyncpa %s558, 1
    %560 = vsyncpa [#allocation5], 1
    %s561 = scalar_lea.sflag [#allocation5], 1
    %562 = vsyncpa %s561, 1

</llo_original>
